<compile_context>
chip_gen: v7x
topology: tpu7x:2x2x1
jax: 0.10.0
libtpu: 0.0.40
codegen_flags: <defaults>
</compile_context>

<pallas_src>
import jax
import jax.numpy as jnp
from jax.experimental import pallas as pl
from jax.experimental.pallas import tpu as pltpu


def _softmax_mix_kernel(w_ref, b_ref, o_ref):
    # Per-head (grid step) views, full-extent 2D slabs resident in VMEM:
    #   w_ref: (I, J)   b_ref: (J, F)   o_ref: (I, F)
    # --- numerically stable softmax over the last axis, in f32, whole tile at once ---
    w = w_ref[...].astype(jnp.float32)
    m = jnp.max(w, axis=-1, keepdims=True)
    e = jnp.exp(w - m)
    denom = jnp.sum(e, axis=-1, keepdims=True)
    p = e * pl.reciprocal(denom, approx=True)            # EUP approx reciprocal (free slot)

    # --- mix on the MXU: bf16 operands, f32 accumulation (native MXU path on all gens) ---
    out = jnp.dot(p.astype(jnp.bfloat16),
                  b_ref[...].astype(jnp.bfloat16),
                  preferred_element_type=jnp.float32)     # (I, F)
    o_ref[...] = out.astype(o_ref.dtype)


def _padded_tile_bytes(shape2d, dtype):
    """Bytes of a 2D VMEM buffer after (8,128)-style tile padding (sublane-packed dtypes)."""
    r, c = shape2d
    itemsize = jnp.dtype(dtype).itemsize
    sublane = 8 * max(1, 4 // itemsize)                   # 8 for f32, 16 for bf16, 32 for int8
    rp = -(-r // sublane) * sublane
    cp = -(-c // 128) * 128
    return rp * cp * itemsize


def model_forward(inputs, weight, bias, *, dropout_p=1.0):
    """JAX/Pallas equivalent of Model.forward.

    inputs : (batch, seq_len, in_features)  -- only its shape is consumed (as in the torch code)
    weight : (in_features, num_heads, head_features)
    bias   : (in_features, num_heads, head_features)
    returns: (in_features, num_heads, head_features)  ('ibf')
    """
    batch_size, seq_len, _ = inputs.shape  # mirrors the torch shape unpack (values unused)
    I, H, J = weight.shape
    Jb, Hb, F = bias.shape
    assert H == Hb and J == Jb, "einsum 'ibj,jbf->ibf' requires head_features == in_features"

    out_dtype = jnp.result_type(weight.dtype, bias.dtype)

    # Training-mode dropout with p >= 1 deterministically zeros both operands -> output is
    # exactly zero. Short-circuit: no kernel launch, no transposes, no HBM traffic.
    if dropout_p >= 1.0:
        return jnp.zeros((I, H, F), out_dtype)
    # TODO(synk): 0 < dropout_p < 1 (stochastic training dropout) modeled as identity (eval mode).

    # H-major relayout so each head is a contiguous, lane-dense 2D slab (cheap/free here).
    w_h = jnp.transpose(weight, (1, 0, 2))                # (H, I, J)
    b_h = jnp.transpose(bias, (1, 0, 2))                  # (H, J, F)

    # Per-grid-step VMEM footprint, padded tile bytes, double-buffered by the pipeline.
    vmem_bytes = 2 * (_padded_tile_bytes((I, J), w_h.dtype)
                      + _padded_tile_bytes((J, F), b_h.dtype)
                      + _padded_tile_bytes((I, F), out_dtype))
    assert vmem_bytes < 16 * 1024 * 1024, "per-head tiles too large; tile I/F before VMEM blows"

    out_h = pl.pallas_call(
        _softmax_mix_kernel,
        out_shape=jax.ShapeDtypeStruct((H, I, F), out_dtype),
        grid=(H,),
        in_specs=[
            pl.BlockSpec((pl.Squeezed(), I, J), lambda h: (h, 0, 0)),
            pl.BlockSpec((pl.Squeezed(), J, F), lambda h: (h, 0, 0)),
        ],
        out_specs=pl.BlockSpec((pl.Squeezed(), I, F), lambda h: (h, 0, 0)),
        compiler_params=pltpu.CompilerParams(
            dimension_semantics=("parallel",)),           # heads shard across TCs on v7x
    )(w_h, b_h)

    return jnp.transpose(out_h, (1, 0, 2))                # (I, H, F), matches torch layout


if __name__ == "__main__":
    # deterministic parameter / input construction
    key = jax.random.PRNGKey(0)
    k_w, k_b, k_x = jax.random.split(key, 3)

    in_features = 32
    head_features = 32          # must equal in_features for the reference einsum to be valid
    num_heads = 1
    batch, seq_len = 2, 8
    dropout_p = 1               # as in the reference script

    weight = jax.random.normal(k_w, (in_features, num_heads, head_features), jnp.float32)
    bias = jax.random.normal(k_b, (in_features, num_heads, head_features), jnp.float32)
    x = jax.random.normal(k_x, (batch, seq_len, in_features), jnp.float32)

    # Reference config (dropout_p = 1): output is exactly zero via the short-circuit path.
    out = model_forward(x, weight, bias, dropout_p=dropout_p)
    jax.block_until_ready(out)
    assert out.shape == (in_features, num_heads, head_features)
    assert not bool(jnp.any(out))

    # Exercise the Pallas kernel path (dropout disabled -> identity on both operands).
    out_kernel = model_forward(x, weight, bias, dropout_p=0.0)
    jax.block_until_ready(out_kernel)
    assert out_kernel.shape == (in_features, num_heads, head_features)
    ref = jnp.einsum("ibj,jbf->ibf", jax.nn.softmax(weight, axis=-1), bias)
    assert bool(jnp.allclose(out_kernel, ref, atol=2e-2, rtol=2e-2))

    # Also exercise the multi-head grid path (H > 1) to cover the "parallel" head axis.
    H2 = 2
    w2 = jax.random.normal(k_w, (in_features, H2, head_features), jnp.float32)
    b2 = jax.random.normal(k_b, (in_features, H2, head_features), jnp.float32)
    out2 = model_forward(x, w2, b2, dropout_p=0.0)
    jax.block_until_ready(out2)
    ref2 = jnp.einsum("ibj,jbf->ibf", jax.nn.softmax(w2, axis=-1), b2)
    assert out2.shape == (in_features, H2, head_features)
    assert bool(jnp.allclose(out2, ref2, atol=2e-2, rtol=2e-2))

    print("KERNEL_OK")
</pallas_src>

<mosaic_0001>
module attributes {stable_mosaic.version = 11 : i64} {
  func.func @_softmax_mix_kernel(%arg0: i32, %arg1: memref<1x32x32xf32, #tpu.memory_space<vmem>>, %arg2: memref<1x32x32xf32, #tpu.memory_space<vmem>>, %arg3: memref<1x32x32xf32, #tpu.memory_space<vmem>>) attributes {dimension_semantics = [#tpu.dimension_semantics<parallel>], iteration_bounds = array<i64: 1>, scalar_prefetch = 0 : i64, scratch_operands = 0 : i64, tpu.core_type = #tpu.core_type<tc>, window_params = [{transform_indices = @transform_0, window_bounds = array<i64: 1, 32, 32>}, {transform_indices = @transform_1, window_bounds = array<i64: 1, 32, 32>}, {transform_indices = @transform_2, window_bounds = array<i64: 1, 32, 32>}]} {
    %c0 = arith.constant 0 : index
    %c0_0 = arith.constant 0 : index
    %c0_1 = arith.constant 0 : index
    %0 = vector.load %arg1[%c0, %c0_0, %c0_1] : memref<1x32x32xf32, #tpu.memory_space<vmem>>, vector<1x32x32xf32>
    %1 = vector.shape_cast %0 : vector<1x32x32xf32> to vector<32x32xf32>
    %cst = arith.constant dense<0xFF800000> : vector<32xf32>
    %2 = vector.multi_reduction <maximumf>, %1, %cst [1] : vector<32x32xf32> to vector<32xf32>
    %3 = vector.shape_cast %2 : vector<32xf32> to vector<32x1xf32>
    %4 = vector.broadcast %3 : vector<32x1xf32> to vector<32x32xf32>
    %5 = arith.subf %1, %4 : vector<32x32xf32>
    %6 = math.exp %5 : vector<32x32xf32>
    %cst_2 = arith.constant dense<0.000000e+00> : vector<32xf32>
    %7 = vector.multi_reduction <add>, %6, %cst_2 [1] : vector<32x32xf32> to vector<32xf32>
    %8 = vector.shape_cast %7 : vector<32xf32> to vector<32x1xf32>
    %9 = tpu.reciprocal %8 {approx = true} : vector<32x1xf32> -> vector<32x1xf32>
    %10 = vector.broadcast %9 : vector<32x1xf32> to vector<32x32xf32>
    %11 = arith.mulf %6, %10 : vector<32x32xf32>
    %12 = arith.truncf %11 : vector<32x32xf32> to vector<32x32xbf16>
    %c0_3 = arith.constant 0 : index
    %c0_4 = arith.constant 0 : index
    %c0_5 = arith.constant 0 : index
    %13 = vector.load %arg2[%c0_3, %c0_4, %c0_5] : memref<1x32x32xf32, #tpu.memory_space<vmem>>, vector<1x32x32xf32>
    %14 = vector.shape_cast %13 : vector<1x32x32xf32> to vector<32x32xf32>
    %15 = arith.truncf %14 : vector<32x32xf32> to vector<32x32xbf16>
    %cst_6 = arith.constant dense<0.000000e+00> : vector<32x32xf32>
    %16 = tpu.matmul %12, %15, %cst_6 {dimension_numbers = #tpu.dot_dimension_numbers<[1], [0], [0], [1], [0, 0, 1, 1], [], []>} : vector<32x32xbf16>, vector<32x32xbf16>, vector<32x32xf32> -> vector<32x32xf32>
    %c0_7 = arith.constant 0 : index
    %c0_8 = arith.constant 0 : index
    %c0_9 = arith.constant 0 : index
    %17 = vector.load %arg3[%c0_7, %c0_8, %c0_9] : memref<1x32x32xf32, #tpu.memory_space<vmem>>, vector<1x32x32xf32>
    %18 = vector.shape_cast %17 : vector<1x32x32xf32> to vector<32x32xf32>
    %19 = vector.shape_cast %16 : vector<32x32xf32> to vector<1x32x32xf32>
    tpu.vector_store %arg3[%c0_7, %c0_8, %c0_9], %19 {strides = array<i32>} : memref<1x32x32xf32, #tpu.memory_space<vmem>>, vector<1x32x32xf32>,
    return
  }
  func.func @transform_0(%arg0: i32) -> (i32, i32, i32) {
    %c0_i32 = arith.constant 0 : i32
    %c0_i32_0 = arith.constant 0 : i32
    %c0_i32_1 = arith.constant 0 : i32
    return %arg0, %c0_i32, %c0_i32_0 : i32, i32, i32
  }
  func.func @transform_1(%arg0: i32) -> (i32, i32, i32) {
    %c0_i32 = arith.constant 0 : i32
    %c0_i32_0 = arith.constant 0 : i32
    %c0_i32_1 = arith.constant 0 : i32
    return %arg0, %c0_i32, %c0_i32_0 : i32, i32, i32
  }
  func.func @transform_2(%arg0: i32) -> (i32, i32, i32) {
    %c0_i32 = arith.constant 0 : i32
    %c0_i32_0 = arith.constant 0 : i32
    %c0_i32_1 = arith.constant 0 : i32
    return %arg0, %c0_i32, %c0_i32_0 : i32, i32, i32
  }
}

</mosaic_0001>

<llo_original>
// kernel: tpu_custom_call.1
$region0: #{tpu_custom_call.1}
  #allocation0 [shape = 'u32[]', space=smem, size = 0x4, offset = 0x4, fixed_abs, tag = 'smem constant byte address 0x4 - core index']
  #allocation1 [shape = 'u32[144,128]{1,0:T(1,128)}', space=vmem, size = 0x12000, scoped, tag = 'internal scratch']
  %s0 = inlined_call_operand.hbm [shape: f32[1,32,32], index: 0, kind: input, shape index: {}]
  %s1 = inlined_call_operand.hbm [shape: f32[1,32,32], index: 1, kind: input, shape index: {}]
  %s2 = inlined_call_operand.hbm [shape: f32[1,32,32], index: 2, kind: output, shape index: {}]
  %s3 = sld [smem:[#allocation0]]
  $region26: #{tpu_custom_call.1} parent=0
    _
  %s5 = ssub.s32 1, %s3
  %s6 = scalar_select 0, %s5, %s3
  $region1: #{tpu_custom_call.1} parent=0
    #allocation2 [shape = 'u8[16384]{0}', space=vmem, size = 0x4000, scoped, tag = 'input window, operand 0, single buffered']
    #allocation3 [shape = 's32[1]{0}', space=sflag, size = 0x4, scoped, tag = 'scoped memory for tpu_custom_call.1']
    #allocation4 [shape = 's32[1]{0}', space=sflag, size = 0x4, scoped, tag = 'scoped memory for tpu_custom_call.1']
    #allocation5 [shape = 'u8[16384]{0}', space=vmem, size = 0x4000, scoped, tag = 'input window, operand 1, single buffered']
    #allocation6 [shape = 's32[1]{0}', space=sflag, size = 0x4, scoped, tag = 'scoped memory for tpu_custom_call.1']
    #allocation7 [shape = 'u8[16384]{0}', space=vmem, size = 0x4000, scoped, tag = 'output window, operand 0, single buffered']
    %7 = vsyncpa [#allocation3], 0
    %8 = vsyncpa [#allocation6], 0
    %9 = vsyncpa [#allocation4], 0
    // Predicated region
    $region2: #{tpu_custom_call.1} parent=1 // pred_check
      _
    $region3: #{tpu_custom_call.1} parent=1 // pred_check_branch
      %11 = sbr.rel (0) target = $region5
    $region4: #{tpu_custom_call.1} parent=1 // pred_region
      %s13 = ssub.s32 512, 512
      %14 = vsyncadd [#allocation3], %s13
      %s15 = sshll.u32 [#allocation2], 4
      %s16 = int_to_ptr.vmem [resolvable:$true] %s15
      %21 = dma.hbm_to_vmem [thread:$0]  %s0, 512, %s16, [#allocation3], 128, 128, 8
    $region5: #{tpu_custom_call.1} parent=1 // pred_fallthru
      _
    // Predicated region
    $region6: #{tpu_custom_call.1} parent=1 // pred_check
      _
    $region7: #{tpu_custom_call.1} parent=1 // pred_check_branch
      %23 = sbr.rel (0) target = $region9
    $region8: #{tpu_custom_call.1} parent=1 // pred_region
      %s25 = ssub.s32 512, 512
      %26 = vsyncadd [#allocation6], %s25
      %s27 = sshll.u32 [#allocation5], 4
      %s28 = int_to_ptr.vmem [resolvable:$true] %s27
      %33 = dma.hbm_to_vmem [thread:$0]  %s1, 512, %s28, [#allocation6], 128, 128, 8
    $region9: #{tpu_custom_call.1} parent=1 // pred_fallthru
      _
    // Predicated region
    $region10: #{tpu_custom_call.1} parent=1 // pred_check
      _
    $region11: #{tpu_custom_call.1} parent=1 // pred_check_branch
      %35 = sbr.rel (0) target = $region13
    $region12: #{tpu_custom_call.1} parent=1 // pred_region
      %36 = dma.done [#allocation3], 512
    $region13: #{tpu_custom_call.1} parent=1 // pred_fallthru
      _
    // Predicated region
    $region14: #{tpu_custom_call.1} parent=1 // pred_check
      _
    $region15: #{tpu_custom_call.1} parent=1 // pred_check_branch
      %38 = sbr.rel (0) target = $region17
    $region16: #{tpu_custom_call.1} parent=1 // pred_region
      %39 = dma.done [#allocation6], 512
    $region17: #{tpu_custom_call.1} parent=1 // pred_fallthru
      _
    %v41 = vld [vmem:[#allocation2] sm:$0xff]
    %v42 = vld [vmem:[#allocation2 + $0x8] sm:$0xff]
    %v43 = vld [vmem:[#allocation2 + $0x10] sm:$0xff]
    %v44 = vld [vmem:[#allocation2 + $0x18] sm:$0xff]
    %vm45 = vcmask 261120
    %v46 = vsel %vm45, %v41, -inf
    %47 = vmax.xlane.f32.xlu0 %v46
    %v48 = vpop.xlane.xlu0 %47
    %v49 = vsel %vm45, %v42, -inf
    %50 = vmax.xlane.f32.xlu0 %v49
    %v51 = vpop.xlane.xlu0 %50
    %v52 = vsel %vm45, %v43, -inf
    %53 = vmax.xlane.f32.xlu0 %v52
    %v54 = vpop.xlane.xlu0 %53
    %v55 = vsel %vm45, %v44, -inf
    %56 = vmax.xlane.f32.xlu0 %v55
    %v57 = vpop.xlane.xlu0 %56
    %v58 = vsub.f32 %v41, %v48
    %v59 = vsub.f32 %v42, %v51
    %v60 = vsub.f32 %v43, %v54
    %v61 = vsub.f32 %v44, %v57
    %v62 = vmul.f32 %v58, 1.442695
    %v63 = vpow.pop %v62
    %v64 = vmul.f32 %v59, 1.442695
    %v65 = vpow.pop %v64
    %v66 = vmul.f32 %v60, 1.442695
    %v67 = vpow.pop %v66
    %v68 = vmul.f32 %v61, 1.442695
    %v69 = vpow.pop %v68
    %v70 = vsel %vm45, %v63, 0.0
    %71 = vadd.xlane.f32.xlu0 %v70
    %v72 = vpop.xlane.xlu0 %71
    %v73 = vsel %vm45, %v65, 0.0
    %74 = vadd.xlane.f32.xlu0 %v73
    %v75 = vpop.xlane.xlu0 %74
    %v76 = vsel %vm45, %v67, 0.0
    %77 = vadd.xlane.f32.xlu0 %v76
    %v78 = vpop.xlane.xlu0 %77
    %v79 = vsel %vm45, %v69, 0.0
    %80 = vadd.xlane.f32.xlu0 %v79
    %v81 = vpop.xlane.xlu0 %80
    %v82 = vrcp.pop %v72
    %v83 = vrcp.pop %v75
    %v84 = vrcp.pop %v78
    %v85 = vrcp.pop %v81
    %v86 = vmul.f32 %v63, %v82
    %v87 = vmul.f32 %v65, %v83
    %v88 = vmul.f32 %v67, %v84
    %v89 = vmul.f32 %v69, %v85
    %v90 = vpack.c.bf16 %v87, %v86
    %v91 = vpack.c.bf16 %v89, %v88
    %v92 = vld [vmem:[#allocation5] sm:$0xff]
    %v93 = vld [vmem:[#allocation5 + $0x8] sm:$0xff]
    %v94 = vld [vmem:[#allocation5 + $0x10] sm:$0xff]
    %v95 = vld [vmem:[#allocation5 + $0x18] sm:$0xff]
    %v96 = vpack.c.bf16 %v93, %v92
    %v97 = vpack.c.bf16 %v95, %v94
    %v99 = vsel %vm45, %v90, 0
    %v102 = vsel %vm45, %v91, 0
    %104 = vmatprep.subr.bf16.mxu0 0
    %105 = vmatpush1.bf16.msra.mxu0 %v96
    %106 = vmatprep.subr.bf16.mxu0 0
    %107 = vmatpush1.bf16.msra.mxu0 %v97
    %108 = vmatprep.subr.bf16.mxu0 0
    %109 = vmatpush1.bf16.msra.mxu0 0
    %110 = vmatprep.subr.bf16.mxu0 0
    %111 = vmatpush1.bf16.msra.mxu0 0
    %112 = vmatprep.subr.bf16.mxu0 0
    %113 = vmatpush1.bf16.msra.mxu0 0
    %114 = vmatprep.subr.bf16.mxu0 0
    %115 = vmatpush1.bf16.msra.mxu0 0
    %116 = vmatprep.subr.bf16.mxu0 0
    %117 = vmatpush1.bf16.msra.mxu0 0
    %118 = vmatprep.subr.bf16.mxu0 0
    %119 = vmatpush1.bf16.msra.mxu0 0
    %120 = vmatprep.subr.bf16.mxu0 0
    %121 = vmatpush1.bf16.msra.mxu0 0
    %122 = vmatprep.subr.bf16.mxu0 0
    %123 = vmatpush1.bf16.msra.mxu0 0
    %124 = vmatprep.subr.bf16.mxu0 0
    %125 = vmatpush1.bf16.msra.mxu0 0
    %126 = vmatprep.subr.bf16.mxu0 0
    %127 = vmatpush1.bf16.msra.mxu0 0
    %128 = vmatprep.subr.bf16.mxu0 0
    %129 = vmatpush1.bf16.msra.mxu0 0
    %130 = vmatprep.subr.bf16.mxu0 0
    %131 = vmatpush1.bf16.msra.mxu0 0
    %132 = vmatprep.subr.bf16.mxu0 0
    %133 = vmatpush1.bf16.msra.mxu0 0
    %134 = vmatprep.subr.bf16.mxu0 0
    %135 = vmatpush1.bf16.msra.mxu0 0
    %136 = vmatprep.mubr.bf16.mxu0 0
    %137 = vmatmul.mubr.bf16.gmra.mrb[0].mxu0 %v99
    %v138 = vpop.f32.mrb[0].mxu0
    %v139 = vadd.f32 0.0, %v138
    %v140 = vpop.f32.mrb[0].mxu0
    %v141 = vpop.f32.mrb[0].mxu0
    %v142 = vadd.f32 0.0, %v141
    %v143 = vpop.f32.mrb[0].mxu0
    %144 = vmatprep.mubr.bf16.mxu0 0
    %145 = vmatmul.mubr.bf16.gmra.mrb[0].mxu0 %v102
    %v146 = vpop.f32.mrb[0].mxu0
    %v147 = vadd.f32 0.0, %v146
    %v148 = vpop.f32.mrb[0].mxu0
    %v149 = vpop.f32.mrb[0].mxu0
    %v150 = vadd.f32 0.0, %v149
    %v151 = vpop.f32.mrb[0].mxu0
    %152 = vdwg.mxu0
    %153 = vst.msk [vmem:[#allocation7] sm:$0xff] %vm45, %v139
    %154 = vst.msk [vmem:[#allocation7 + $0x8] sm:$0xff] %vm45, %v142
    %155 = vst.msk [vmem:[#allocation7 + $0x10] sm:$0xff] %vm45, %v147
    %156 = vst.msk [vmem:[#allocation7 + $0x18] sm:$0xff] %vm45, %v150
    // Predicated region
    $region18: #{tpu_custom_call.1} parent=1 // pred_check
      _
    $region19: #{tpu_custom_call.1} parent=1 // pred_check_branch
      %158 = sbr.rel (0) target = $region21
    $region20: #{tpu_custom_call.1} parent=1 // pred_region
      %s160 = ssub.s32 512, 512
      %161 = vsyncadd [#allocation4], %s160
      %s162 = sshll.u32 [#allocation7], 4
      %s163 = int_to_ptr.vmem [resolvable:$true] %s162
      %168 = dma.vmem_to_hbm [thread:$0]  %s163, 512, %s2, [#allocation4], 128, 128, 8
    $region21: #{tpu_custom_call.1} parent=1 // pred_fallthru
      _
    // Predicated region
    $region22: #{tpu_custom_call.1} parent=1 // pred_check
      _
    $region23: #{tpu_custom_call.1} parent=1 // pred_check_branch
      %170 = sbr.rel (0) target = $region25
    $region24: #{tpu_custom_call.1} parent=1 // pred_region
      %171 = dma.done [#allocation4], 512
    $region25: #{tpu_custom_call.1} parent=1 // pred_fallthru
      _
    %172 = vsyncpa [#allocation3], 1
    %173 = vsyncpa [#allocation6], 1
    %174 = vsyncpa [#allocation4], 1

</llo_original>
